<compile_context>
chip_gen: v6e
topology: v6e:2x2x1
jax: 0.10.0
libtpu: 0.0.40
codegen_flags: <defaults>
</compile_context>

<pallas_src>
import jax
import jax.numpy as jnp
from jax.experimental import pallas as pl
from jax.experimental.pallas import tpu as pltpu


def mlp_kernel(x_ref, w1_ref, b1_ref, w2_ref, b2_ref, o_ref):
    # x_ref:  (TB, 2048) bf16
    # w1_ref: (2048, 128) bf16,  b1_ref: (1, 128) f32
    # w2_ref: (128, NCp)  bf16,  b2_ref: (1, NCp) f32
    # o_ref:  (TB, NCp)   f32
    h = jnp.dot(x_ref[...], w1_ref[...], preferred_element_type=jnp.float32)
    h = h + b1_ref[...]
    # Dropout (eval mode) -> identity
    h = jnp.maximum(h, 0.0)  # ReLU
    logits = jnp.dot(h.astype(w2_ref.dtype), w2_ref[...],
                     preferred_element_type=jnp.float32)
    logits = logits + b2_ref[...]
    o_ref[...] = logits.astype(o_ref.dtype)


def _round_up(x, m):
    return ((x + m - 1) // m) * m


def adapted_style_cluster_cnn(x, w1, b1, w2, b2, *, block_b=512):
    """x: (B, C, H, W) float32 with C*H*W == 2048. Returns (B, num_classes) f32."""
    B = x.shape[0]
    x_flat = x.reshape(B, -1)          # NCHW row-major flatten == torch.nn.Flatten
    in_features = x_flat.shape[1]
    assert in_features == 2048, "AdaptedStyleClusterCNN expects 2048 flattened features"
    hidden = w1.shape[1]
    num_classes = w2.shape[1]

    # Lane-dense output padding (classes -> multiple of 128).
    nc_pad = _round_up(max(num_classes, 128), 128)
    pad_nc = nc_pad - num_classes

    # Batch padding: tile is a multiple of 8 sublanes, batch padded to a tile multiple.
    b_pad8 = _round_up(B, 8)
    tb = min(block_b, b_pad8)
    b_padded = _round_up(B, tb)
    pad_b = b_padded - B

    # bf16 on the bandwidth-dominant streams, f32 accumulation in-kernel.
    x_b16 = x_flat.astype(jnp.bfloat16)
    if pad_b:
        x_b16 = jnp.pad(x_b16, ((0, pad_b), (0, 0)))
    w1_b16 = w1.astype(jnp.bfloat16)
    w2_b16 = jnp.pad(w2.astype(jnp.bfloat16), ((0, 0), (0, pad_nc)))
    b1_p = b1.reshape(1, hidden).astype(jnp.float32)
    b2_p = jnp.pad(b2.astype(jnp.float32), ((0, pad_nc),)).reshape(1, nc_pad)

    grid = (b_padded // tb,)

    cost = pl.CostEstimate(
        flops=2 * b_padded * in_features * hidden + 2 * b_padded * hidden * nc_pad,
        transcendentals=0,
        bytes_accessed=(x_b16.size * 2 + w1_b16.size * 2 + w2_b16.size * 2
                        + b1_p.size * 4 + b2_p.size * 4 + b_padded * nc_pad * 4),
    )

    out = pl.pallas_call(
        mlp_kernel,
        out_shape=jax.ShapeDtypeStruct((b_padded, nc_pad), jnp.float32),
        grid_spec=pltpu.PrefetchScalarGridSpec(
            num_scalar_prefetch=0,
            grid=grid,
            in_specs=[
                pl.BlockSpec((tb, in_features), lambda i: (i, 0)),       # x tile (streamed)
                pl.BlockSpec((in_features, hidden), lambda i: (0, 0)),   # w1 resident
                pl.BlockSpec((1, hidden), lambda i: (0, 0)),             # b1 resident
                pl.BlockSpec((hidden, nc_pad), lambda i: (0, 0)),        # w2 resident
                pl.BlockSpec((1, nc_pad), lambda i: (0, 0)),             # b2 resident
            ],
            out_specs=pl.BlockSpec((tb, nc_pad), lambda i: (i, 0)),
        ),
        compiler_params=pltpu.CompilerParams(
            dimension_semantics=("parallel",),
            vmem_limit_bytes=64 << 20,
        ),
        cost_estimate=cost,
    )(x_b16, w1_b16, b1_p, w2_b16, b2_p)

    return out[:B, :num_classes]


def init_params(key, num_classes):
    """Deterministic synthetic parameter init (shapes from the module __init__)."""
    k1, k2, k3, k4 = jax.random.split(key, 4)
    # Linear(2048, 128)
    w1 = jax.random.normal(k1, (2048, 128), jnp.float32) * (1.0 / jnp.sqrt(2048.0))
    b1 = jax.random.normal(k2, (128,), jnp.float32) * 0.01
    # Linear(128, num_classes)
    w2 = jax.random.normal(k3, (128, num_classes), jnp.float32) * (1.0 / jnp.sqrt(128.0))
    b2 = jax.random.normal(k4, (num_classes,), jnp.float32) * 0.01
    return w1, b1, w2, b2


if __name__ == "__main__":
    key = jax.random.PRNGKey(0)
    k_x, k_p = jax.random.split(key)

    # Small NCHW input: 8 x 16 x 16 = 2048 features per example.
    B, C, H, W = 2, 8, 16, 16
    num_classes = 10

    x = jax.random.normal(k_x, (B, C, H, W), jnp.float32)
    w1, b1, w2, b2 = init_params(k_p, num_classes)

    logits = adapted_style_cluster_cnn(x, w1, b1, w2, b2)
    logits = jax.block_until_ready(logits)

    # Pure-JAX reference (dropout = identity in eval mode), with the same bf16
    # rounding of x/w1/w2/h so tolerances stay tight while accumulation is f32.
    x_flat = x.reshape(B, -1)
    xb = x_flat.astype(jnp.bfloat16).astype(jnp.float32)
    w1b = w1.astype(jnp.bfloat16).astype(jnp.float32)
    w2b = w2.astype(jnp.bfloat16).astype(jnp.float32)
    h_ref = jnp.maximum(xb @ w1b + b1, 0.0)
    ref = h_ref.astype(jnp.bfloat16).astype(jnp.float32) @ w2b + b2

    assert logits.shape == (B, num_classes)
    assert jnp.allclose(logits, ref, atol=2e-2, rtol=2e-2), (
        float(jnp.max(jnp.abs(logits - ref))))

    print("KERNEL_OK")
</pallas_src>

<mosaic_0001>
module attributes {stable_mosaic.version = 11 : i64} {
  func.func @mlp_kernel(%arg0: i32, %arg1: memref<8x2048xbf16, #tpu.memory_space<vmem>>, %arg2: memref<2048x128xbf16, #tpu.memory_space<vmem>>, %arg3: memref<1x128xf32, #tpu.memory_space<vmem>>, %arg4: memref<128x128xbf16, #tpu.memory_space<vmem>>, %arg5: memref<1x128xf32, #tpu.memory_space<vmem>>, %arg6: memref<8x128xf32, #tpu.memory_space<vmem>>) attributes {dimension_semantics = [#tpu.dimension_semantics<parallel>], iteration_bounds = array<i64: 1>, scalar_prefetch = 0 : i64, scratch_operands = 0 : i64, tpu.core_type = #tpu.core_type<tc>, window_params = [{transform_indices = @transform_0, window_bounds = array<i64: 8, 2048>}, {pipeline_mode = #tpu.pipeline_mode<synchronous>, transform_indices = @transform_1, window_bounds = array<i64: 2048, 128>}, {pipeline_mode = #tpu.pipeline_mode<synchronous>, transform_indices = @transform_2, window_bounds = array<i64: 1, 128>}, {pipeline_mode = #tpu.pipeline_mode<synchronous>, transform_indices = @transform_3, window_bounds = array<i64: 128, 128>}, {pipeline_mode = #tpu.pipeline_mode<synchronous>, transform_indices = @transform_4, window_bounds = array<i64: 1, 128>}, {transform_indices = @transform_5, window_bounds = array<i64: 8, 128>}]} {
    %c0 = arith.constant 0 : index
    %c0_0 = arith.constant 0 : index
    %0 = vector.load %arg1[%c0, %c0_0] : memref<8x2048xbf16, #tpu.memory_space<vmem>>, vector<8x2048xbf16>
    %c0_1 = arith.constant 0 : index
    %c0_2 = arith.constant 0 : index
    %1 = vector.load %arg2[%c0_1, %c0_2] : memref<2048x128xbf16, #tpu.memory_space<vmem>>, vector<2048x128xbf16>
    %cst = arith.constant dense<0.000000e+00> : vector<8x128xf32>
    %2 = tpu.matmul %0, %1, %cst {dimension_numbers = #tpu.dot_dimension_numbers<[1], [0], [0], [1], [0, 0, 1, 1], [], []>} : vector<8x2048xbf16>, vector<2048x128xbf16>, vector<8x128xf32> -> vector<8x128xf32>
    %c0_3 = arith.constant 0 : index
    %c0_4 = arith.constant 0 : index
    %3 = vector.load %arg3[%c0_3, %c0_4] : memref<1x128xf32, #tpu.memory_space<vmem>>, vector<1x128xf32>
    %4 = vector.broadcast %3 : vector<1x128xf32> to vector<8x128xf32>
    %5 = arith.addf %2, %4 : vector<8x128xf32>
    %cst_5 = arith.constant 0.000000e+00 : f32
    %6 = vector.broadcast %cst_5 : f32 to vector<8x128xf32>
    %7 = arith.maximumf %5, %6 : vector<8x128xf32>
    %8 = arith.truncf %7 : vector<8x128xf32> to vector<8x128xbf16>
    %c0_6 = arith.constant 0 : index
    %c0_7 = arith.constant 0 : index
    %9 = vector.load %arg4[%c0_6, %c0_7] : memref<128x128xbf16, #tpu.memory_space<vmem>>, vector<128x128xbf16>
    %cst_8 = arith.constant dense<0.000000e+00> : vector<8x128xf32>
    %10 = tpu.matmul %8, %9, %cst_8 {dimension_numbers = #tpu.dot_dimension_numbers<[1], [0], [0], [1], [0, 0, 1, 1], [], []>} : vector<8x128xbf16>, vector<128x128xbf16>, vector<8x128xf32> -> vector<8x128xf32>
    %c0_9 = arith.constant 0 : index
    %c0_10 = arith.constant 0 : index
    %11 = vector.load %arg5[%c0_9, %c0_10] : memref<1x128xf32, #tpu.memory_space<vmem>>, vector<1x128xf32>
    %12 = vector.broadcast %11 : vector<1x128xf32> to vector<8x128xf32>
    %13 = arith.addf %10, %12 : vector<8x128xf32>
    %c0_11 = arith.constant 0 : index
    %c0_12 = arith.constant 0 : index
    %14 = vector.load %arg6[%c0_11, %c0_12] : memref<8x128xf32, #tpu.memory_space<vmem>>, vector<8x128xf32>
    tpu.vector_store %arg6[%c0_11, %c0_12], %13 {strides = array<i32>} : memref<8x128xf32, #tpu.memory_space<vmem>>, vector<8x128xf32>,
    return
  }
  func.func @transform_0(%arg0: i32) -> (i32, i32) {
    %c0_i32 = arith.constant 0 : i32
    %c0_i32_0 = arith.constant 0 : i32
    return %arg0, %c0_i32 : i32, i32
  }
  func.func @transform_1(%arg0: i32) -> (i32, i32) {
    %c0_i32 = arith.constant 0 : i32
    %c0_i32_0 = arith.constant 0 : i32
    %c0_i32_1 = arith.constant 0 : i32
    return %c0_i32, %c0_i32_0 : i32, i32
  }
  func.func @transform_2(%arg0: i32) -> (i32, i32) {
    %c0_i32 = arith.constant 0 : i32
    %c0_i32_0 = arith.constant 0 : i32
    %c0_i32_1 = arith.constant 0 : i32
    return %c0_i32, %c0_i32_0 : i32, i32
  }
  func.func @transform_3(%arg0: i32) -> (i32, i32) {
    %c0_i32 = arith.constant 0 : i32
    %c0_i32_0 = arith.constant 0 : i32
    %c0_i32_1 = arith.constant 0 : i32
    return %c0_i32, %c0_i32_0 : i32, i32
  }
  func.func @transform_4(%arg0: i32) -> (i32, i32) {
    %c0_i32 = arith.constant 0 : i32
    %c0_i32_0 = arith.constant 0 : i32
    %c0_i32_1 = arith.constant 0 : i32
    return %c0_i32, %c0_i32_0 : i32, i32
  }
  func.func @transform_5(%arg0: i32) -> (i32, i32) {
    %c0_i32 = arith.constant 0 : i32
    %c0_i32_0 = arith.constant 0 : i32
    return %arg0, %c0_i32 : i32, i32
  }
}

</mosaic_0001>

<llo_original>
// kernel: tpu_custom_call.1
$region0: #{tpu_custom_call.1}
  #allocation0 [shape = 'u32[]', space=smem, size = 0x4, offset = 0x4, fixed_abs, tag = 'smem constant byte address 0x4 - core index']
  #allocation1 [shape = 'u32[144,128]{1,0:T(1,128)}', space=vmem, size = 0x12000, scoped, tag = 'internal scratch']
  %s0 = inlined_call_operand.hbm [shape: bf16[8,2048], index: 0, kind: input, shape index: {}]
  %s1 = inlined_call_operand.hbm [shape: bf16[2048,128], index: 1, kind: input, shape index: {}]
  %s2 = inlined_call_operand.vmem [shape: f32[1,128], index: 2, kind: input, shape index: {}]
  %s3 = inlined_call_operand.hbm [shape: bf16[128,128], index: 3, kind: input, shape index: {}]
  %s4 = inlined_call_operand.vmem [shape: f32[1,128], index: 4, kind: input, shape index: {}]
  %s5 = inlined_call_operand.hbm [shape: f32[8,128], index: 5, kind: output, shape index: {}]
  %s6 = sld [smem:[#allocation0]]
  $region42: #{tpu_custom_call.1} parent=0
    _
  %s8 = ssub.s32 1, %s6
  %s9 = scalar_select 0, %s8, %s6
  $region1: #{tpu_custom_call.1} parent=0
    #allocation2 [shape = 'u8[32768]{0}', space=vmem, size = 0x8000, scoped, tag = 'input window, operand 0, single buffered']
    #allocation3 [shape = 's32[1]{0}', space=sflag, size = 0x4, scoped, tag = 'scoped memory for tpu_custom_call.1']
    #allocation4 [shape = 's32[1]{0}', space=sflag, size = 0x4, scoped, tag = 'scoped memory for tpu_custom_call.1']
    #allocation5 [shape = 'u8[524288]{0}', space=vmem, size = 0x80000, scoped, tag = 'input window, operand 1, single buffered']
    #allocation6 [shape = 's32[1]{0}', space=sflag, size = 0x4, scoped, tag = 'scoped memory for tpu_custom_call.1']
    #allocation7 [shape = 'u8[32768]{0}', space=vmem, size = 0x8000, scoped, tag = 'input window, operand 3, single buffered']
    #allocation8 [shape = 'u8[4096]{0}', space=vmem, size = 0x1000, scoped, tag = 'output window, operand 0, single buffered']
    %10 = vsyncpa [#allocation3], 0
    %11 = vsyncpa [#allocation6], 0
    %12 = vsyncpa [#allocation4], 0
    // Predicated region
    $region2: #{tpu_custom_call.1} parent=1 // pred_check
      _
    $region3: #{tpu_custom_call.1} parent=1 // pred_check_branch
      %14 = sbr.rel (0) target = $region5
    $region4: #{tpu_custom_call.1} parent=1 // pred_region
      %s16 = ssub.s32 1024, 1024
      %17 = vsyncadd [#allocation3], %s16
      %s19 = sshll.u32 [#allocation2], 4
      %s20 = int_to_ptr.vmem [resolvable:$true] %s19
      %22 = dma.hbm_to_vmem [thread:$0]  %s0, 1024, %s20, [#allocation3]
    $region5: #{tpu_custom_call.1} parent=1 // pred_fallthru
      _
    // Predicated region
    $region6: #{tpu_custom_call.1} parent=1 // pred_check
      _
    $region7: #{tpu_custom_call.1} parent=1 // pred_check_branch
      %24 = sbr.rel (0) target = $region9
    $region8: #{tpu_custom_call.1} parent=1 // pred_region
      %s26 = ssub.s32 16384, 16384
      %27 = vsyncadd [#allocation6], %s26
      %s28 = sshll.u32 [#allocation5], 4
      %s29 = int_to_ptr.vmem [resolvable:$true] %s28
      %34 = dma.hbm_to_vmem [thread:$0]  %s1, 16384, %s29, [#allocation6], 64, 64, 4
    $region9: #{tpu_custom_call.1} parent=1 // pred_fallthru
      _
    // Predicated region
    $region10: #{tpu_custom_call.1} parent=1 // pred_check
      _
    $region11: #{tpu_custom_call.1} parent=1 // pred_check_branch
      %36 = sbr.rel (0) target = $region13
    $region12: #{tpu_custom_call.1} parent=1 // pred_region
      _
    $region13: #{tpu_custom_call.1} parent=1 // pred_fallthru
      _
    // Predicated region
    $region14: #{tpu_custom_call.1} parent=1 // pred_check
      _
    $region15: #{tpu_custom_call.1} parent=1 // pred_check_branch
      %38 = sbr.rel (0) target = $region17
    $region16: #{tpu_custom_call.1} parent=1 // pred_region
      %s40 = ssub.s32 1024, 1024
      %41 = vsyncadd [#allocation6], %s40
      %s42 = sshll.u32 [#allocation7], 4
      %s43 = int_to_ptr.vmem [resolvable:$true] %s42
      %48 = dma.hbm_to_vmem [thread:$0]  %s3, 1024, %s43, [#allocation6], 64, 64, 4
    $region17: #{tpu_custom_call.1} parent=1 // pred_fallthru
      _
    // Predicated region
    $region18: #{tpu_custom_call.1} parent=1 // pred_check
      _
    $region19: #{tpu_custom_call.1} parent=1 // pred_check_branch
      %50 = sbr.rel (0) target = $region21
    $region20: #{tpu_custom_call.1} parent=1 // pred_region
      _
    $region21: #{tpu_custom_call.1} parent=1 // pred_fallthru
      _
    // Predicated region
    $region22: #{tpu_custom_call.1} parent=1 // pred_check
      _
    $region23: #{tpu_custom_call.1} parent=1 // pred_check_branch
      %52 = sbr.rel (0) target = $region25
    $region24: #{tpu_custom_call.1} parent=1 // pred_region
      %53 = dma.done [#allocation3], 1024
    $region25: #{tpu_custom_call.1} parent=1 // pred_fallthru
      _
    // Predicated region
    $region26: #{tpu_custom_call.1} parent=1 // pred_check
      _
    $region27: #{tpu_custom_call.1} parent=1 // pred_check_branch
      %55 = sbr.rel (0) target = $region29
    $region28: #{tpu_custom_call.1} parent=1 // pred_region
      %56 = dma.done [#allocation6], 16384
    $region29: #{tpu_custom_call.1} parent=1 // pred_fallthru
      _
    // Predicated region
    $region30: #{tpu_custom_call.1} parent=1 // pred_check
      _
    $region31: #{tpu_custom_call.1} parent=1 // pred_check_branch
      %58 = sbr.rel (0) target = $region33
    $region32: #{tpu_custom_call.1} parent=1 // pred_region
      %59 = dma.done [#allocation6], 1024
    $region33: #{tpu_custom_call.1} parent=1 // pred_fallthru
      _
    %v61 = vld [vmem:[#allocation2] sm:$0xff]
    %v62 = vld [vmem:[#allocation2 + $0x8] sm:$0xff]
    %v63 = vld [vmem:[#allocation2 + $0x10] sm:$0xff]
    %v64 = vld [vmem:[#allocation2 + $0x18] sm:$0xff]
    %v65 = vld [vmem:[#allocation2 + $0x20] sm:$0xff]
    %v66 = vld [vmem:[#allocation2 + $0x28] sm:$0xff]
    %v67 = vld [vmem:[#allocation2 + $0x30] sm:$0xff]
    %v68 = vld [vmem:[#allocation2 + $0x38] sm:$0xff]
    %v69 = vld [vmem:[#allocation5] sm:$0xf]
    %v70 = vld [vmem:[#allocation5 + $0x4] sm:$0xf]
    %v71 = vld [vmem:[#allocation5 + $0x8] sm:$0xf]
    %v72 = vld [vmem:[#allocation5 + $0xc] sm:$0xf]
    %v73 = vld [vmem:[#allocation5 + $0x10] sm:$0xf]
    %v74 = vld [vmem:[#allocation5 + $0x14] sm:$0xf]
    %v75 = vld [vmem:[#allocation5 + $0x18] sm:$0xf]
    %v76 = vld [vmem:[#allocation5 + $0x1c] sm:$0xf]
    %v77 = vld [vmem:[#allocation5 + $0x20] sm:$0xf]
    %v78 = vld [vmem:[#allocation5 + $0x24] sm:$0xf]
    %v79 = vld [vmem:[#allocation5 + $0x28] sm:$0xf]
    %v80 = vld [vmem:[#allocation5 + $0x2c] sm:$0xf]
    %v81 = vld [vmem:[#allocation5 + $0x30] sm:$0xf]
    %v82 = vld [vmem:[#allocation5 + $0x34] sm:$0xf]
    %v83 = vld [vmem:[#allocation5 + $0x38] sm:$0xf]
    %v84 = vld [vmem:[#allocation5 + $0x3c] sm:$0xf]
    %v85 = vld [vmem:[#allocation5 + $0x40] sm:$0xf]
    %v86 = vld [vmem:[#allocation5 + $0x44] sm:$0xf]
    %v87 = vld [vmem:[#allocation5 + $0x48] sm:$0xf]
    %v88 = vld [vmem:[#allocation5 + $0x4c] sm:$0xf]
    %v89 = vld [vmem:[#allocation5 + $0x50] sm:$0xf]
    %v90 = vld [vmem:[#allocation5 + $0x54] sm:$0xf]
    %v91 = vld [vmem:[#allocation5 + $0x58] sm:$0xf]
    %v92 = vld [vmem:[#allocation5 + $0x5c] sm:$0xf]
    %v93 = vld [vmem:[#allocation5 + $0x60] sm:$0xf]
    %v94 = vld [vmem:[#allocation5 + $0x64] sm:$0xf]
    %v95 = vld [vmem:[#allocation5 + $0x68] sm:$0xf]
    %v96 = vld [vmem:[#allocation5 + $0x6c] sm:$0xf]
    %v97 = vld [vmem:[#allocation5 + $0x70] sm:$0xf]
    %v98 = vld [vmem:[#allocation5 + $0x74] sm:$0xf]
    %v99 = vld [vmem:[#allocation5 + $0x78] sm:$0xf]
    %v100 = vld [vmem:[#allocation5 + $0x7c] sm:$0xf]
    %v101 = vld [vmem:[#allocation5 + $0x80] sm:$0xf]
    %v102 = vld [vmem:[#allocation5 + $0x84] sm:$0xf]
    %v103 = vld [vmem:[#allocation5 + $0x88] sm:$0xf]
    %v104 = vld [vmem:[#allocation5 + $0x8c] sm:$0xf]
    %v105 = vld [vmem:[#allocation5 + $0x90] sm:$0xf]
    %v106 = vld [vmem:[#allocation5 + $0x94] sm:$0xf]
    %v107 = vld [vmem:[#allocation5 + $0x98] sm:$0xf]
    %v108 = vld [vmem:[#allocation5 + $0x9c] sm:$0xf]
    %v109 = vld [vmem:[#allocation5 + $0xa0] sm:$0xf]
    %v110 = vld [vmem:[#allocation5 + $0xa4] sm:$0xf]
    %v111 = vld [vmem:[#allocation5 + $0xa8] sm:$0xf]
    %v112 = vld [vmem:[#allocation5 + $0xac] sm:$0xf]
    %v113 = vld [vmem:[#allocation5 + $0xb0] sm:$0xf]
    %v114 = vld [vmem:[#allocation5 + $0xb4] sm:$0xf]
    %v115 = vld [vmem:[#allocation5 + $0xb8] sm:$0xf]
    %v116 = vld [vmem:[#allocation5 + $0xbc] sm:$0xf]
    %v117 = vld [vmem:[#allocation5 + $0xc0] sm:$0xf]
    %v118 = vld [vmem:[#allocation5 + $0xc4] sm:$0xf]
    %v119 = vld [vmem:[#allocation5 + $0xc8] sm:$0xf]
    %v120 = vld [vmem:[#allocation5 + $0xcc] sm:$0xf]
    %v121 = vld [vmem:[#allocation5 + $0xd0] sm:$0xf]
    %v122 = vld [vmem:[#allocation5 + $0xd4] sm:$0xf]
    %v123 = vld [vmem:[#allocation5 + $0xd8] sm:$0xf]
    %v124 = vld [vmem:[#allocation5 + $0xdc] sm:$0xf]
    %v125 = vld [vmem:[#allocation5 + $0xe0] sm:$0xf]
    %v126 = vld [vmem:[#allocation5 + $0xe4] sm:$0xf]
    %v127 = vld [vmem:[#allocation5 + $0xe8] sm:$0xf]
    %v128 = vld [vmem:[#allocation5 + $0xec] sm:$0xf]
    %v129 = vld [vmem:[#allocation5 + $0xf0] sm:$0xf]
    %v130 = vld [vmem:[#allocation5 + $0xf4] sm:$0xf]
    %v131 = vld [vmem:[#allocation5 + $0xf8] sm:$0xf]
    %v132 = vld [vmem:[#allocation5 + $0xfc] sm:$0xf]
    %v133 = vld [vmem:[#allocation5 + $0x100] sm:$0xf]
    %v134 = vld [vmem:[#allocation5 + $0x104] sm:$0xf]
    %v135 = vld [vmem:[#allocation5 + $0x108] sm:$0xf]
    %v136 = vld [vmem:[#allocation5 + $0x10c] sm:$0xf]
    %v137 = vld [vmem:[#allocation5 + $0x110] sm:$0xf]
    %v138 = vld [vmem:[#allocation5 + $0x114] sm:$0xf]
    %v139 = vld [vmem:[#allocation5 + $0x118] sm:$0xf]
    %v140 = vld [vmem:[#allocation5 + $0x11c] sm:$0xf]
    %v141 = vld [vmem:[#allocation5 + $0x120] sm:$0xf]
    %v142 = vld [vmem:[#allocation5 + $0x124] sm:$0xf]
    %v143 = vld [vmem:[#allocation5 + $0x128] sm:$0xf]
    %v144 = vld [vmem:[#allocation5 + $0x12c] sm:$0xf]
    %v145 = vld [vmem:[#allocation5 + $0x130] sm:$0xf]
    %v146 = vld [vmem:[#allocation5 + $0x134] sm:$0xf]
    %v147 = vld [vmem:[#allocation5 + $0x138] sm:$0xf]
    %v148 = vld [vmem:[#allocation5 + $0x13c] sm:$0xf]
    %v149 = vld [vmem:[#allocation5 + $0x140] sm:$0xf]
    %v150 = vld [vmem:[#allocation5 + $0x144] sm:$0xf]
    %v151 = vld [vmem:[#allocation5 + $0x148] sm:$0xf]
    %v152 = vld [vmem:[#allocation5 + $0x14c] sm:$0xf]
    %v153 = vld [vmem:[#allocation5 + $0x150] sm:$0xf]
    %v154 = vld [vmem:[#allocation5 + $0x154] sm:$0xf]
    %v155 = vld [vmem:[#allocation5 + $0x158] sm:$0xf]
    %v156 = vld [vmem:[#allocation5 + $0x15c] sm:$0xf]
    %v157 = vld [vmem:[#allocation5 + $0x160] sm:$0xf]
    %v158 = vld [vmem:[#allocation5 + $0x164] sm:$0xf]
    %v159 = vld [vmem:[#allocation5 + $0x168] sm:$0xf]
    %v160 = vld [vmem:[#allocation5 + $0x16c] sm:$0xf]
    %v161 = vld [vmem:[#allocation5 + $0x170] sm:$0xf]
    %v162 = vld [vmem:[#allocation5 + $0x174] sm:$0xf]
    %v163 = vld [vmem:[#allocation5 + $0x178] sm:$0xf]
    %v164 = vld [vmem:[#allocation5 + $0x17c] sm:$0xf]
    %v165 = vld [vmem:[#allocation5 + $0x180] sm:$0xf]
    %v166 = vld [vmem:[#allocation5 + $0x184] sm:$0xf]
    %v167 = vld [vmem:[#allocation5 + $0x188] sm:$0xf]
    %v168 = vld [vmem:[#allocation5 + $0x18c] sm:$0xf]
    %v169 = vld [vmem:[#allocation5 + $0x190] sm:$0xf]
    %v170 = vld [vmem:[#allocation5 + $0x194] sm:$0xf]
    %v171 = vld [vmem:[#allocation5 + $0x198] sm:$0xf]
    %v172 = vld [vmem:[#allocation5 + $0x19c] sm:$0xf]
    %v173 = vld [vmem:[#allocation5 + $0x1a0] sm:$0xf]
    %v174 = vld [vmem:[#allocation5 + $0x1a4] sm:$0xf]
    %v175 = vld [vmem:[#allocation5 + $0x1a8] sm:$0xf]
    %v176 = vld [vmem:[#allocation5 + $0x1ac] sm:$0xf]
    %v177 = vld [vmem:[#allocation5 + $0x1b0] sm:$0xf]
    %v178 = vld [vmem:[#allocation5 + $0x1b4] sm:$0xf]
    %v179 = vld [vmem:[#allocation5 + $0x1b8] sm:$0xf]
    %v180 = vld [vmem:[#allocation5 + $0x1bc] sm:$0xf]
    %v181 = vld [vmem:[#allocation5 + $0x1c0] sm:$0xf]
    %v182 = vld [vmem:[#allocation5 + $0x1c4] sm:$0xf]
    %v183 = vld [vmem:[#allocation5 + $0x1c8] sm:$0xf]
    %v184 = vld [vmem:[#allocation5 + $0x1cc] sm:$0xf]
    %v185 = vld [vmem:[#allocation5 + $0x1d0] sm:$0xf]
    %v186 = vld [vmem:[#allocation5 + $0x1d4] sm:$0xf]
    %v187 = vld [vmem:[#allocation5 + $0x1d8] sm:$0xf]
    %v188 = vld [vmem:[#allocation5 + $0x1dc] sm:$0xf]
    %v189 = vld [vmem:[#allocation5 + $0x1e0] sm:$0xf]
    %v190 = vld [vmem:[#allocation5 + $0x1e4] sm:$0xf]
    %v191 = vld [vmem:[#allocation5 + $0x1e8] sm:$0xf]
    %v192 = vld [vmem:[#allocation5 + $0x1ec] sm:$0xf]
    %v193 = vld [vmem:[#allocation5 + $0x1f0] sm:$0xf]
    %v194 = vld [vmem:[#allocation5 + $0x1f4] sm:$0xf]
    %v195 = vld [vmem:[#allocation5 + $0x1f8] sm:$0xf]
    %v196 = vld [vmem:[#allocation5 + $0x1fc] sm:$0xf]
    %v197 = vld [vmem:[#allocation5 + $0x200] sm:$0xf]
    %v198 = vld [vmem:[#allocation5 + $0x204] sm:$0xf]
    %v199 = vld [vmem:[#allocation5 + $0x208] sm:$0xf]
    %v200 = vld [vmem:[#allocation5 + $0x20c] sm:$0xf]
    %v201 = vld [vmem:[#allocation5 + $0x210] sm:$0xf]
    %v202 = vld [vmem:[#allocation5 + $0x214] sm:$0xf]
    %v203 = vld [vmem:[#allocation5 + $0x218] sm:$0xf]
    %v204 = vld [vmem:[#allocation5 + $0x21c] sm:$0xf]
    %v205 = vld [vmem:[#allocation5 + $0x220] sm:$0xf]
    %v206 = vld [vmem:[#allocation5 + $0x224] sm:$0xf]
    %v207 = vld [vmem:[#allocation5 + $0x228] sm:$0xf]
    %v208 = vld [vmem:[#allocation5 + $0x22c] sm:$0xf]
    %v209 = vld [vmem:[#allocation5 + $0x230] sm:$0xf]
    %v210 = vld [vmem:[#allocation5 + $0x234] sm:$0xf]
    %v211 = vld [vmem:[#allocation5 + $0x238] sm:$0xf]
    %v212 = vld [vmem:[#allocation5 + $0x23c] sm:$0xf]
    %v213 = vld [vmem:[#allocation5 + $0x240] sm:$0xf]
    %v214 = vld [vmem:[#allocation5 + $0x244] sm:$0xf]
    %v215 = vld [vmem:[#allocation5 + $0x248] sm:$0xf]
    %v216 = vld [vmem:[#allocation5 + $0x24c] sm:$0xf]
    %v217 = vld [vmem:[#allocation5 + $0x250] sm:$0xf]
    %v218 = vld [vmem:[#allocation5 + $0x254] sm:$0xf]
    %v219 = vld [vmem:[#allocation5 + $0x258] sm:$0xf]
    %v220 = vld [vmem:[#allocation5 + $0x25c] sm:$0xf]
    %v221 = vld [vmem:[#allocation5 + $0x260] sm:$0xf]
    %v222 = vld [vmem:[#allocation5 + $0x264] sm:$0xf]
    %v223 = vld [vmem:[#allocation5 + $0x268] sm:$0xf]
    %v224 = vld [vmem:[#allocation5 + $0x26c] sm:$0xf]
    %v225 = vld [vmem:[#allocation5 + $0x270] sm:$0xf]
    %v226 = vld [vmem:[#allocation5 + $0x274] sm:$0xf]
    %v227 = vld [vmem:[#allocation5 + $0x278] sm:$0xf]
    %v228 = vld [vmem:[#allocation5 + $0x27c] sm:$0xf]
    %v229 = vld [vmem:[#allocation5 + $0x280] sm:$0xf]
    %v230 = vld [vmem:[#allocation5 + $0x284] sm:$0xf]
    %v231 = vld [vmem:[#allocation5 + $0x288] sm:$0xf]
    %v232 = vld [vmem:[#allocation5 + $0x28c] sm:$0xf]
    %v233 = vld [vmem:[#allocation5 + $0x290] sm:$0xf]
    %v234 = vld [vmem:[#allocation5 + $0x294] sm:$0xf]
    %v235 = vld [vmem:[#allocation5 + $0x298] sm:$0xf]
    %v236 = vld [vmem:[#allocation5 + $0x29c] sm:$0xf]
    %v237 = vld [vmem:[#allocation5 + $0x2a0] sm:$0xf]
    %v238 = vld [vmem:[#allocation5 + $0x2a4] sm:$0xf]
    %v239 = vld [vmem:[#allocation5 + $0x2a8] sm:$0xf]
    %v240 = vld [vmem:[#allocation5 + $0x2ac] sm:$0xf]
    %v241 = vld [vmem:[#allocation5 + $0x2b0] sm:$0xf]
    %v242 = vld [vmem:[#allocation5 + $0x2b4] sm:$0xf]
    %v243 = vld [vmem:[#allocation5 + $0x2b8] sm:$0xf]
    %v244 = vld [vmem:[#allocation5 + $0x2bc] sm:$0xf]
    %v245 = vld [vmem:[#allocation5 + $0x2c0] sm:$0xf]
    %v246 = vld [vmem:[#allocation5 + $0x2c4] sm:$0xf]
    %v247 = vld [vmem:[#allocation5 + $0x2c8] sm:$0xf]
    %v248 = vld [vmem:[#allocation5 + $0x2cc] sm:$0xf]
    %v249 = vld [vmem:[#allocation5 + $0x2d0] sm:$0xf]
    %v250 = vld [vmem:[#allocation5 + $0x2d4] sm:$0xf]
    %v251 = vld [vmem:[#allocation5 + $0x2d8] sm:$0xf]
    %v252 = vld [vmem:[#allocation5 + $0x2dc] sm:$0xf]
    %v253 = vld [vmem:[#allocation5 + $0x2e0] sm:$0xf]
    %v254 = vld [vmem:[#allocation5 + $0x2e4] sm:$0xf]
    %v255 = vld [vmem:[#allocation5 + $0x2e8] sm:$0xf]
    %v256 = vld [vmem:[#allocation5 + $0x2ec] sm:$0xf]
    %v257 = vld [vmem:[#allocation5 + $0x2f0] sm:$0xf]
    %v258 = vld [vmem:[#allocation5 + $0x2f4] sm:$0xf]
    %v259 = vld [vmem:[#allocation5 + $0x2f8] sm:$0xf]
    %v260 = vld [vmem:[#allocation5 + $0x2fc] sm:$0xf]
    %v261 = vld [vmem:[#allocation5 + $0x300] sm:$0xf]
    %v262 = vld [vmem:[#allocation5 + $0x304] sm:$0xf]
    %v263 = vld [vmem:[#allocation5 + $0x308] sm:$0xf]
    %v264 = vld [vmem:[#allocation5 + $0x30c] sm:$0xf]
    %v265 = vld [vmem:[#allocation5 + $0x310] sm:$0xf]
    %v266 = vld [vmem:[#allocation5 + $0x314] sm:$0xf]
    %v267 = vld [vmem:[#allocation5 + $0x318] sm:$0xf]
    %v268 = vld [vmem:[#allocation5 + $0x31c] sm:$0xf]
    %v269 = vld [vmem:[#allocation5 + $0x320] sm:$0xf]
    %v270 = vld [vmem:[#allocation5 + $0x324] sm:$0xf]
    %v271 = vld [vmem:[#allocation5 + $0x328] sm:$0xf]
    %v272 = vld [vmem:[#allocation5 + $0x32c] sm:$0xf]
    %v273 = vld [vmem:[#allocation5 + $0x330] sm:$0xf]
    %v274 = vld [vmem:[#allocation5 + $0x334] sm:$0xf]
    %v275 = vld [vmem:[#allocation5 + $0x338] sm:$0xf]
    %v276 = vld [vmem:[#allocation5 + $0x33c] sm:$0xf]
    %v277 = vld [vmem:[#allocation5 + $0x340] sm:$0xf]
    %v278 = vld [vmem:[#allocation5 + $0x344] sm:$0xf]
    %v279 = vld [vmem:[#allocation5 + $0x348] sm:$0xf]
    %v280 = vld [vmem:[#allocation5 + $0x34c] sm:$0xf]
    %v281 = vld [vmem:[#allocation5 + $0x350] sm:$0xf]
    %v282 = vld [vmem:[#allocation5 + $0x354] sm:$0xf]
    %v283 = vld [vmem:[#allocation5 + $0x358] sm:$0xf]
    %v284 = vld [vmem:[#allocation5 + $0x35c] sm:$0xf]
    %v285 = vld [vmem:[#allocation5 + $0x360] sm:$0xf]
    %v286 = vld [vmem:[#allocation5 + $0x364] sm:$0xf]
    %v287 = vld [vmem:[#allocation5 + $0x368] sm:$0xf]
    %v288 = vld [vmem:[#allocation5 + $0x36c] sm:$0xf]
    %v289 = vld [vmem:[#allocation5 + $0x370] sm:$0xf]
    %v290 = vld [vmem:[#allocation5 + $0x374] sm:$0xf]
    %v291 = vld [vmem:[#allocation5 + $0x378] sm:$0xf]
    %v292 = vld [vmem:[#allocation5 + $0x37c] sm:$0xf]
    %v293 = vld [vmem:[#allocation5 + $0x380] sm:$0xf]
    %v294 = vld [vmem:[#allocation5 + $0x384] sm:$0xf]
    %v295 = vld [vmem:[#allocation5 + $0x388] sm:$0xf]
    %v296 = vld [vmem:[#allocation5 + $0x38c] sm:$0xf]
    %v297 = vld [vmem:[#allocation5 + $0x390] sm:$0xf]
    %v298 = vld [vmem:[#allocation5 + $0x394] sm:$0xf]
    %v299 = vld [vmem:[#allocation5 + $0x398] sm:$0xf]
    %v300 = vld [vmem:[#allocation5 + $0x39c] sm:$0xf]
    %v301 = vld [vmem:[#allocation5 + $0x3a0] sm:$0xf]
    %v302 = vld [vmem:[#allocation5 + $0x3a4] sm:$0xf]
    %v303 = vld [vmem:[#allocation5 + $0x3a8] sm:$0xf]
    %v304 = vld [vmem:[#allocation5 + $0x3ac] sm:$0xf]
    %v305 = vld [vmem:[#allocation5 + $0x3b0] sm:$0xf]
    %v306 = vld [vmem:[#allocation5 + $0x3b4] sm:$0xf]
    %v307 = vld [vmem:[#allocation5 + $0x3b8] sm:$0xf]
    %v308 = vld [vmem:[#allocation5 + $0x3bc] sm:$0xf]
    %v309 = vld [vmem:[#allocation5 + $0x3c0] sm:$0xf]
    %v310 = vld [vmem:[#allocation5 + $0x3c4] sm:$0xf]
    %v311 = vld [vmem:[#allocation5 + $0x3c8] sm:$0xf]
    %v312 = vld [vmem:[#allocation5 + $0x3cc] sm:$0xf]
    %v313 = vld [vmem:[#allocation5 + $0x3d0] sm:$0xf]
    %v314 = vld [vmem:[#allocation5 + $0x3d4] sm:$0xf]
    %v315 = vld [vmem:[#allocation5 + $0x3d8] sm:$0xf]
    %v316 = vld [vmem:[#allocation5 + $0x3dc] sm:$0xf]
    %v317 = vld [vmem:[#allocation5 + $0x3e0] sm:$0xf]
    %v318 = vld [vmem:[#allocation5 + $0x3e4] sm:$0xf]
    %v319 = vld [vmem:[#allocation5 + $0x3e8] sm:$0xf]
    %v320 = vld [vmem:[#allocation5 + $0x3ec] sm:$0xf]
    %v321 = vld [vmem:[#allocation5 + $0x3f0] sm:$0xf]
    %v322 = vld [vmem:[#allocation5 + $0x3f4] sm:$0xf]
    %v323 = vld [vmem:[#allocation5 + $0x3f8] sm:$0xf]
    %v324 = vld [vmem:[#allocation5 + $0x3fc] sm:$0xf]
    %v325 = vld [vmem:[%s2] sm:$0x1]
    %v327 = vlaneseq
    %v328 = vshrl.u32 %v327, 7
    %v329 = vsub.s32 0, %v328
    %v330 = vrot.slane %v325, %v329
    %v340 = vunpack.c.l.b16 %v61
    %v341 = vunpack.c.h.b16 %v61
    %v342 = vunpack.c.l.b16 %v62
    %v343 = vunpack.c.h.b16 %v62
    %v344 = vunpack.c.l.b16 %v63
    %v345 = vunpack.c.h.b16 %v63
    %v346 = vunpack.c.l.b16 %v64
    %v347 = vunpack.c.h.b16 %v64
    %v348 = vunpack.c.l.b16 %v65
    %v349 = vunpack.c.h.b16 %v65
    %v350 = vunpack.c.l.b16 %v66
    %v351 = vunpack.c.h.b16 %v66
    %v352 = vunpack.c.l.b16 %v67
    %v353 = vunpack.c.h.b16 %v67
    %v354 = vunpack.c.l.b16 %v68
    %v355 = vunpack.c.h.b16 %v68
    %v356 = vpack.c.b16 %v340, %v340
    %v357 = vpack.c.b16 %v341, %v341
    %v358 = vpack.c.b16 %v342, %v342
    %v359 = vpack.c.b16 %v343, %v343
    %v360 = vpack.c.b16 %v344, %v344
    %v361 = vpack.c.b16 %v345, %v345
    %v362 = vpack.c.b16 %v346, %v346
    %v363 = vpack.c.b16 %v347, %v347
    %v364 = vpack.c.b16 %v348, %v348
    %v365 = vpack.c.b16 %v349, %v349
    %v366 = vpack.c.b16 %v350, %v350
    %v367 = vpack.c.b16 %v351, %v351
    %v368 = vpack.c.b16 %v352, %v352
    %v369 = vpack.c.b16 %v353, %v353
    %v370 = vpack.c.b16 %v354, %v354
    %v371 = vpack.c.b16 %v355, %v355
    %v644 = vunpack.c.l.b16 %v69
    %v645 = vunpack.c.l.b16 %v70
    %v646 = vunpack.c.l.b16 %v71
    %v647 = vunpack.c.l.b16 %v72
    %v648 = vunpack.c.l.b16 %v73
    %v649 = vunpack.c.l.b16 %v74
    %v650 = vunpack.c.l.b16 %v75
    %v651 = vunpack.c.l.b16 %v76
    %v652 = vunpack.c.l.b16 %v77
    %v653 = vunpack.c.l.b16 %v78
    %v654 = vunpack.c.l.b16 %v79
    %v655 = vunpack.c.l.b16 %v80
    %v656 = vunpack.c.l.b16 %v81
    %v657 = vunpack.c.l.b16 %v82
    %v658 = vunpack.c.l.b16 %v83
    %v659 = vunpack.c.l.b16 %v84
    %v660 = vunpack.c.l.b16 %v85
    %v661 = vunpack.c.l.b16 %v86
    %v662 = vunpack.c.l.b16 %v87
    %v663 = vunpack.c.l.b16 %v88
    %v664 = vunpack.c.l.b16 %v89
    %v665 = vunpack.c.l.b16 %v90
    %v666 = vunpack.c.l.b16 %v91
    %v667 = vunpack.c.l.b16 %v92
    %v668 = vunpack.c.l.b16 %v93
    %v669 = vunpack.c.l.b16 %v94
    %v670 = vunpack.c.l.b16 %v95
    %v671 = vunpack.c.l.b16 %v96
    %v672 = vunpack.c.l.b16 %v97
    %v673 = vunpack.c.l.b16 %v98
    %v674 = vunpack.c.l.b16 %v99
    %v675 = vunpack.c.l.b16 %v100
    %v676 = vunpack.c.l.b16 %v101
    %v677 = vunpack.c.l.b16 %v102
    %v678 = vunpack.c.l.b16 %v103
    %v679 = vunpack.c.l.b16 %v104
    %v680 = vunpack.c.l.b16 %v105
    %v681 = vunpack.c.l.b16 %v106
    %v682 = vunpack.c.l.b16 %v107
    %v683 = vunpack.c.l.b16 %v108
    %v684 = vunpack.c.l.b16 %v109
    %v685 = vunpack.c.l.b16 %v110
    %v686 = vunpack.c.l.b16 %v111
    %v687 = vunpack.c.l.b16 %v112
    %v688 = vunpack.c.l.b16 %v113
    %v689 = vunpack.c.l.b16 %v114
    %v690 = vunpack.c.l.b16 %v115
    %v691 = vunpack.c.l.b16 %v116
    %v692 = vunpack.c.l.b16 %v117
    %v693 = vunpack.c.l.b16 %v118
    %v694 = vunpack.c.l.b16 %v119
    %v695 = vunpack.c.l.b16 %v120
    %v696 = vunpack.c.l.b16 %v121
    %v697 = vunpack.c.l.b16 %v122
    %v698 = vunpack.c.l.b16 %v123
    %v699 = vunpack.c.l.b16 %v124
    %v700 = vunpack.c.l.b16 %v125
    %v701 = vunpack.c.l.b16 %v126
    %v702 = vunpack.c.l.b16 %v127
    %v703 = vunpack.c.l.b16 %v128
    %v704 = vunpack.c.l.b16 %v129
    %v705 = vunpack.c.l.b16 %v130
    %v706 = vunpack.c.l.b16 %v131
    %v707 = vunpack.c.l.b16 %v132
    %v708 = vunpack.c.l.b16 %v133
    %v709 = vunpack.c.l.b16 %v134
    %v710 = vunpack.c.l.b16 %v135
    %v711 = vunpack.c.l.b16 %v136
    %v712 = vunpack.c.l.b16 %v137
    %v713 = vunpack.c.l.b16 %v138
    %v714 = vunpack.c.l.b16 %v139
    %v715 = vunpack.c.l.b16 %v140
    %v716 = vunpack.c.l.b16 %v141
    %v717 = vunpack.c.l.b16 %v142
    %v718 = vunpack.c.l.b16 %v143
    %v719 = vunpack.c.l.b16 %v144
    %v720 = vunpack.c.l.b16 %v145
    %v721 = vunpack.c.l.b16 %v146
    %v722 = vunpack.c.l.b16 %v147
    %v723 = vunpack.c.l.b16 %v148
    %v724 = vunpack.c.l.b16 %v149
    %v725 = vunpack.c.l.b16 %v150
    %v726 = vunpack.c.l.b16 %v151
    %v727 = vunpack.c.l.b16 %v152
    %v728 = vunpack.c.l.b16 %v153
    %v729 = vunpack.c.l.b16 %v154
    %v730 = vunpack.c.l.b16 %v155
    %v731 = vunpack.c.l.b16 %v156
    %v732 = vunpack.c.l.b16 %v157
    %v733 = vunpack.c.l.b16 %v158
    %v734 = vunpack.c.l.b16 %v159
    %v735 = vunpack.c.l.b16 %v160
    %v736 = vunpack.c.l.b16 %v161
    %v737 = vunpack.c.l.b16 %v162
    %v738 = vunpack.c.l.b16 %v163
    %v739 = vunpack.c.l.b16 %v164
    %v740 = vunpack.c.l.b16 %v165
    %v741 = vunpack.c.l.b16 %v166
    %v742 = vunpack.c.l.b16 %v167
    %v743 = vunpack.c.l.b16 %v168
    %v744 = vunpack.c.l.b16 %v169
    %v745 = vunpack.c.l.b16 %v170
    %v746 = vunpack.c.l.b16 %v171
    %v747 = vunpack.c.l.b16 %v172
    %v748 = vunpack.c.l.b16 %v173
    %v749 = vunpack.c.l.b16 %v174
    %v750 = vunpack.c.l.b16 %v175
    %v751 = vunpack.c.l.b16 %v176
    %v752 = vunpack.c.l.b16 %v177
    %v753 = vunpack.c.l.b16 %v178
    %v754 = vunpack.c.l.b16 %v179
    %v755 = vunpack.c.l.b16 %v180
    %v756 = vunpack.c.l.b16 %v181
    %v757 = vunpack.c.l.b16 %v182
    %v758 = vunpack.c.l.b16 %v183
    %v759 = vunpack.c.l.b16 %v184
    %v760 = vunpack.c.l.b16 %v185
    %v761 = vunpack.c.l.b16 %v186
    %v762 = vunpack.c.l.b16 %v187
    %v763 = vunpack.c.l.b16 %v188
    %v764 = vunpack.c.l.b16 %v189
    %v765 = vunpack.c.l.b16 %v190
    %v766 = vunpack.c.l.b16 %v191
    %v767 = vunpack.c.l.b16 %v192
    %v768 = vunpack.c.l.b16 %v193
    %v769 = vunpack.c.l.b16 %v194
    %v770 = vunpack.c.l.b16 %v195
    %v771 = vunpack.c.l.b16 %v196
    %v772 = vunpack.c.l.b16 %v197
    %v773 = vunpack.c.l.b16 %v198
    %v774 = vunpack.c.l.b16 %v199
    %v775 = vunpack.c.l.b16 %v200
    %v776 = vunpack.c.l.b16 %v201
    %v777 = vunpack.c.l.b16 %v202
    %v778 = vunpack.c.l.b16 %v203
    %v779 = vunpack.c.l.b16 %v204
    %v780 = vunpack.c.l.b16 %v205
    %v781 = vunpack.c.l.b16 %v206
    %v782 = vunpack.c.l.b16 %v207
    %v783 = vunpack.c.l.b16 %v208
    %v784 = vunpack.c.l.b16 %v209
    %v785 = vunpack.c.l.b16 %v210
    %v786 = vunpack.c.l.b16 %v211
    %v787 = vunpack.c.l.b16 %v212
    %v788 = vunpack.c.l.b16 %v213
    %v789 = vunpack.c.l.b16 %v214
    %v790 = vunpack.c.l.b16 %v215
    %v791 = vunpack.c.l.b16 %v216
    %v792 = vunpack.c.l.b16 %v217
    %v793 = vunpack.c.l.b16 %v218
    %v794 = vunpack.c.l.b16 %v219
    %v795 = vunpack.c.l.b16 %v220
    %v796 = vunpack.c.l.b16 %v221
    %v797 = vunpack.c.l.b16 %v222
    %v798 = vunpack.c.l.b16 %v223
    %v799 = vunpack.c.l.b16 %v224
    %v800 = vunpack.c.l.b16 %v225
    %v801 = vunpack.c.l.b16 %v226
    %v802 = vunpack.c.l.b16 %v227
    %v803 = vunpack.c.l.b16 %v228
    %v804 = vunpack.c.l.b16 %v229
    %v805 = vunpack.c.l.b16 %v230
    %v806 = vunpack.c.l.b16 %v231
    %v807 = vunpack.c.l.b16 %v232
    %v808 = vunpack.c.l.b16 %v233
    %v809 = vunpack.c.l.b16 %v234
    %v810 = vunpack.c.l.b16 %v235
    %v811 = vunpack.c.l.b16 %v236
    %v812 = vunpack.c.l.b16 %v237
    %v813 = vunpack.c.l.b16 %v238
    %v814 = vunpack.c.l.b16 %v239
    %v815 = vunpack.c.l.b16 %v240
    %v816 = vunpack.c.l.b16 %v241
    %v817 = vunpack.c.l.b16 %v242
    %v818 = vunpack.c.l.b16 %v243
    %v819 = vunpack.c.l.b16 %v244
    %v820 = vunpack.c.l.b16 %v245
    %v821 = vunpack.c.l.b16 %v246
    %v822 = vunpack.c.l.b16 %v247
    %v823 = vunpack.c.l.b16 %v248
    %v824 = vunpack.c.l.b16 %v249
    %v825 = vunpack.c.l.b16 %v250
    %v826 = vunpack.c.l.b16 %v251
    %v827 = vunpack.c.l.b16 %v252
    %v828 = vunpack.c.l.b16 %v253
    %v829 = vunpack.c.l.b16 %v254
    %v830 = vunpack.c.l.b16 %v255
    %v831 = vunpack.c.l.b16 %v256
    %v832 = vunpack.c.l.b16 %v257
    %v833 = vunpack.c.l.b16 %v258
    %v834 = vunpack.c.l.b16 %v259
    %v835 = vunpack.c.l.b16 %v260
    %v836 = vunpack.c.l.b16 %v261
    %v837 = vunpack.c.l.b16 %v262
    %v838 = vunpack.c.l.b16 %v263
    %v839 = vunpack.c.l.b16 %v264
    %v840 = vunpack.c.l.b16 %v265
    %v841 = vunpack.c.l.b16 %v266
    %v842 = vunpack.c.l.b16 %v267
    %v843 = vunpack.c.l.b16 %v268
    %v844 = vunpack.c.l.b16 %v269
    %v845 = vunpack.c.l.b16 %v270
    %v846 = vunpack.c.l.b16 %v271
    %v847 = vunpack.c.l.b16 %v272
    %v848 = vunpack.c.l.b16 %v273
    %v849 = vunpack.c.l.b16 %v274
    %v850 = vunpack.c.l.b16 %v275
    %v851 = vunpack.c.l.b16 %v276
    %v852 = vunpack.c.l.b16 %v277
    %v853 = vunpack.c.l.b16 %v278
    %v854 = vunpack.c.l.b16 %v279
    %v855 = vunpack.c.l.b16 %v280
    %v856 = vunpack.c.l.b16 %v281
    %v857 = vunpack.c.l.b16 %v282
    %v858 = vunpack.c.l.b16 %v283
    %v859 = vunpack.c.l.b16 %v284
    %v860 = vunpack.c.l.b16 %v285
    %v861 = vunpack.c.l.b16 %v286
    %v862 = vunpack.c.l.b16 %v287
    %v863 = vunpack.c.l.b16 %v288
    %v864 = vunpack.c.l.b16 %v289
    %v865 = vunpack.c.l.b16 %v290
    %v866 = vunpack.c.l.b16 %v291
    %v867 = vunpack.c.l.b16 %v292
    %v868 = vunpack.c.l.b16 %v293
    %v869 = vunpack.c.l.b16 %v294
    %v870 = vunpack.c.l.b16 %v295
    %v871 = vunpack.c.l.b16 %v296
    %v872 = vunpack.c.l.b16 %v297
    %v873 = vunpack.c.l.b16 %v298
    %v874 = vunpack.c.l.b16 %v299
    %v875 = vunpack.c.l.b16 %v300
    %v876 = vunpack.c.l.b16 %v301
    %v877 = vunpack.c.l.b16 %v302
    %v878 = vunpack.c.l.b16 %v303
    %v879 = vunpack.c.l.b16 %v304
    %v880 = vunpack.c.l.b16 %v305
    %v881 = vunpack.c.l.b16 %v306
    %v882 = vunpack.c.l.b16 %v307
    %v883 = vunpack.c.l.b16 %v308
    %v884 = vunpack.c.l.b16 %v309
    %v885 = vunpack.c.l.b16 %v310
    %v886 = vunpack.c.l.b16 %v311
    %v887 = vunpack.c.l.b16 %v312
    %v888 = vunpack.c.l.b16 %v313
    %v889 = vunpack.c.l.b16 %v314
    %v890 = vunpack.c.l.b16 %v315
    %v891 = vunpack.c.l.b16 %v316
    %v892 = vunpack.c.l.b16 %v317
    %v893 = vunpack.c.l.b16 %v318
    %v894 = vunpack.c.l.b16 %v319
    %v895 = vunpack.c.l.b16 %v320
    %v896 = vunpack.c.l.b16 %v321
    %v897 = vunpack.c.l.b16 %v322
    %v898 = vunpack.c.l.b16 %v323
    %v899 = vunpack.c.l.b16 %v324
    %v900 = vpack.c.b16 %v645, %v644
    %v901 = vpack.c.b16 %v647, %v646
    %v902 = vpack.c.b16 %v649, %v648
    %v903 = vpack.c.b16 %v651, %v650
    %v904 = vpack.c.b16 %v653, %v652
    %v905 = vpack.c.b16 %v655, %v654
    %v906 = vpack.c.b16 %v657, %v656
    %v907 = vpack.c.b16 %v659, %v658
    %v908 = vpack.c.b16 %v661, %v660
    %v909 = vpack.c.b16 %v663, %v662
    %v910 = vpack.c.b16 %v665, %v664
    %v911 = vpack.c.b16 %v667, %v666
    %v912 = vpack.c.b16 %v669, %v668
    %v913 = vpack.c.b16 %v671, %v670
    %v914 = vpack.c.b16 %v673, %v672
    %v915 = vpack.c.b16 %v675, %v674
    %v916 = vpack.c.b16 %v677, %v676
    %v917 = vpack.c.b16 %v679, %v678
    %v918 = vpack.c.b16 %v681, %v680
    %v919 = vpack.c.b16 %v683, %v682
    %v920 = vpack.c.b16 %v685, %v684
    %v921 = vpack.c.b16 %v687, %v686
    %v922 = vpack.c.b16 %v689, %v688
    %v923 = vpack.c.b16 %v691, %v690
    %v924 = vpack.c.b16 %v693, %v692
    %v925 = vpack.c.b16 %v695, %v694
    %v926 = vpack.c.b16 %v697, %v696
    %v927 = vpack.c.b16 %v699, %v698
    %v928 = vpack.c.b16 %v701, %v700
    %v929 = vpack.c.b16 %v703, %v702
    %v930 = vpack.c.b16 %v705, %v704
    %v931 = vpack.c.b16 %v707, %v706
    %v932 = vpack.c.b16 %v709, %v708
    %v933 = vpack.c.b16 %v711, %v710
    %v934 = vpack.c.b16 %v713, %v712
    %v935 = vpack.c.b16 %v715, %v714
    %v936 = vpack.c.b16 %v717, %v716
    %v937 = vpack.c.b16 %v719, %v718
    %v938 = vpack.c.b16 %v721, %v720
    %v939 = vpack.c.b16 %v723, %v722
    %v940 = vpack.c.b16 %v725, %v724
    %v941 = vpack.c.b16 %v727, %v726
    %v942 = vpack.c.b16 %v729, %v728
    %v943 = vpack.c.b16 %v731, %v730
    %v944 = vpack.c.b16 %v733, %v732
    %v945 = vpack.c.b16 %v735, %v734
    %v946 = vpack.c.b16 %v737, %v736
    %v947 = vpack.c.b16 %v739, %v738
    %v948 = vpack.c.b16 %v741, %v740
    %v949 = vpack.c.b16 %v743, %v742
    %v950 = vpack.c.b16 %v745, %v744
    %v951 = vpack.c.b16 %v747, %v746
    %v952 = vpack.c.b16 %v749, %v748
    %v953 = vpack.c.b16 %v751, %v750
    %v954 = vpack.c.b16 %v753, %v752
    %v955 = vpack.c.b16 %v755, %v754
    %v956 = vpack.c.b16 %v757, %v756
    %v957 = vpack.c.b16 %v759, %v758
    %v958 = vpack.c.b16 %v761, %v760
    %v959 = vpack.c.b16 %v763, %v762
    %v960 = vpack.c.b16 %v765, %v764
    %v961 = vpack.c.b16 %v767, %v766
    %v962 = vpack.c.b16 %v769, %v768
    %v963 = vpack.c.b16 %v771, %v770
    %v964 = vpack.c.b16 %v773, %v772
    %v965 = vpack.c.b16 %v775, %v774
    %v966 = vpack.c.b16 %v777, %v776
    %v967 = vpack.c.b16 %v779, %v778
    %v968 = vpack.c.b16 %v781, %v780
    %v969 = vpack.c.b16 %v783, %v782
    %v970 = vpack.c.b16 %v785, %v784
    %v971 = vpack.c.b16 %v787, %v786
    %v972 = vpack.c.b16 %v789, %v788
    %v973 = vpack.c.b16 %v791, %v790
    %v974 = vpack.c.b16 %v793, %v792
    %v975 = vpack.c.b16 %v795, %v794
    %v976 = vpack.c.b16 %v797, %v796
    %v977 = vpack.c.b16 %v799, %v798
    %v978 = vpack.c.b16 %v801, %v800
    %v979 = vpack.c.b16 %v803, %v802
    %v980 = vpack.c.b16 %v805, %v804
    %v981 = vpack.c.b16 %v807, %v806
    %v982 = vpack.c.b16 %v809, %v808
    %v983 = vpack.c.b16 %v811, %v810
    %v984 = vpack.c.b16 %v813, %v812
    %v985 = vpack.c.b16 %v815, %v814
    %v986 = vpack.c.b16 %v817, %v816
    %v987 = vpack.c.b16 %v819, %v818
    %v988 = vpack.c.b16 %v821, %v820
    %v989 = vpack.c.b16 %v823, %v822
    %v990 = vpack.c.b16 %v825, %v824
    %v991 = vpack.c.b16 %v827, %v826
    %v992 = vpack.c.b16 %v829, %v828
    %v993 = vpack.c.b16 %v831, %v830
    %v994 = vpack.c.b16 %v833, %v832
    %v995 = vpack.c.b16 %v835, %v834
    %v996 = vpack.c.b16 %v837, %v836
    %v997 = vpack.c.b16 %v839, %v838
    %v998 = vpack.c.b16 %v841, %v840
    %v999 = vpack.c.b16 %v843, %v842
    %v1000 = vpack.c.b16 %v845, %v844
    %v1001 = vpack.c.b16 %v847, %v846
    %v1002 = vpack.c.b16 %v849, %v848
    %v1003 = vpack.c.b16 %v851, %v850
    %v1004 = vpack.c.b16 %v853, %v852
    %v1005 = vpack.c.b16 %v855, %v854
    %v1006 = vpack.c.b16 %v857, %v856
    %v1007 = vpack.c.b16 %v859, %v858
    %v1008 = vpack.c.b16 %v861, %v860
    %v1009 = vpack.c.b16 %v863, %v862
    %v1010 = vpack.c.b16 %v865, %v864
    %v1011 = vpack.c.b16 %v867, %v866
    %v1012 = vpack.c.b16 %v869, %v868
    %v1013 = vpack.c.b16 %v871, %v870
    %v1014 = vpack.c.b16 %v873, %v872
    %v1015 = vpack.c.b16 %v875, %v874
    %v1016 = vpack.c.b16 %v877, %v876
    %v1017 = vpack.c.b16 %v879, %v878
    %v1018 = vpack.c.b16 %v881, %v880
    %v1019 = vpack.c.b16 %v883, %v882
    %v1020 = vpack.c.b16 %v885, %v884
    %v1021 = vpack.c.b16 %v887, %v886
    %v1022 = vpack.c.b16 %v889, %v888
    %v1023 = vpack.c.b16 %v891, %v890
    %v1024 = vpack.c.b16 %v893, %v892
    %v1025 = vpack.c.b16 %v895, %v894
    %v1026 = vpack.c.b16 %v897, %v896
    %v1027 = vpack.c.b16 %v899, %v898
    %1156 = vmatprep.subr.bf16.mxu0 0
    %1157 = vmatpush1.bf16.msra.mxu0 %v907
    %1158 = vmatprep.subr.bf16.mxu0 0
    %1159 = vmatpush1.bf16.msra.mxu0 %v906
    %1160 = vmatprep.subr.bf16.mxu0 0
    %1161 = vmatpush1.bf16.msra.mxu0 %v905
    %1162 = vmatprep.subr.bf16.mxu0 0
    %1163 = vmatpush1.bf16.msra.mxu0 %v904
    %1164 = vmatprep.subr.bf16.mxu0 0
    %1165 = vmatpush1.bf16.msra.mxu0 %v903
    %1166 = vmatprep.subr.bf16.mxu0 0
    %1167 = vmatpush1.bf16.msra.mxu0 %v902
    %1168 = vmatprep.subr.bf16.mxu0 0
    %1169 = vmatpush1.bf16.msra.mxu0 %v901
    %1170 = vmatprep.subr.bf16.mxu0 0
    %1171 = vmatpush1.bf16.msra.mxu0 %v900
    %1172 = vmatprep.subr.bf16.mxu0 0
    %1173 = vmatpush2.bf16.msra.mxu0 %v915
    %1174 = vmatprep.subr.bf16.mxu0 0
    %1175 = vmatpush2.bf16.msra.mxu0 %v914
    %1176 = vmatprep.subr.bf16.mxu0 0
    %1177 = vmatpush2.bf16.msra.mxu0 %v913
    %1178 = vmatprep.subr.bf16.mxu0 0
    %1179 = vmatpush2.bf16.msra.mxu0 %v912
    %1180 = vmatprep.subr.bf16.mxu0 0
    %1181 = vmatpush2.bf16.msra.mxu0 %v911
    %1182 = vmatprep.subr.bf16.mxu0 0
    %1183 = vmatpush2.bf16.msra.mxu0 %v910
    %1184 = vmatprep.subr.bf16.mxu0 0
    %1185 = vmatpush2.bf16.msra.mxu0 %v909
    %1186 = vmatprep.subr.bf16.mxu0 0
    %1187 = vmatpush2.bf16.msra.mxu0 %v908
    %1188 = vmatprep.mubr.bf16.mxu0 %v357
    %1189 = vmatmul.mubr.bf16.gmra.mxu0 %v356
    %v1190 = vpop.f32.mrf.mxu0
    %v1191 = vadd.f32 %v330, %v1190
    %v1192 = vpop.f32.mrf.mxu0
    %v1193 = vpop.f32.mrf.mxu0
    %v1194 = vpop.f32.mrf.mxu0
    %1195 = vdwg.mxu0
    %1196 = vmatprep.subr.bf16.mxu0 0
    %1197 = vmatpush1.bf16.msra.mxu0 %v923
    %1198 = vmatprep.subr.bf16.mxu0 0
    %1199 = vmatpush1.bf16.msra.mxu0 %v922
    %1200 = vmatprep.subr.bf16.mxu0 0
    %1201 = vmatpush1.bf16.msra.mxu0 %v921
    %1202 = vmatprep.subr.bf16.mxu0 0
    %1203 = vmatpush1.bf16.msra.mxu0 %v920
    %1204 = vmatprep.subr.bf16.mxu0 0
    %1205 = vmatpush1.bf16.msra.mxu0 %v919
    %1206 = vmatprep.subr.bf16.mxu0 0
    %1207 = vmatpush1.bf16.msra.mxu0 %v918
    %1208 = vmatprep.subr.bf16.mxu0 0
    %1209 = vmatpush1.bf16.msra.mxu0 %v917
    %1210 = vmatprep.subr.bf16.mxu0 0
    %1211 = vmatpush1.bf16.msra.mxu0 %v916
    %1212 = vmatprep.subr.bf16.mxu0 0
    %1213 = vmatpush2.bf16.msra.mxu0 %v931
    %1214 = vmatprep.subr.bf16.mxu0 0
    %1215 = vmatpush2.bf16.msra.mxu0 %v930
    %1216 = vmatprep.subr.bf16.mxu0 0
    %1217 = vmatpush2.bf16.msra.mxu0 %v929
    %1218 = vmatprep.subr.bf16.mxu0 0
    %1219 = vmatpush2.bf16.msra.mxu0 %v928
    %1220 = vmatprep.subr.bf16.mxu0 0
    %1221 = vmatpush2.bf16.msra.mxu0 %v927
    %1222 = vmatprep.subr.bf16.mxu0 0
    %1223 = vmatpush2.bf16.msra.mxu0 %v926
    %1224 = vmatprep.subr.bf16.mxu0 0
    %1225 = vmatpush2.bf16.msra.mxu0 %v925
    %1226 = vmatprep.subr.bf16.mxu0 0
    %1227 = vmatpush2.bf16.msra.mxu0 %v924
    %1228 = vmatprep.mubr.bf16.mxu0 %v359
    %1229 = vmatmul.mubr.bf16.gmra.mxu0 %v358
    %v1230 = vpop.f32.mrf.mxu0
    %v1231 = vadd.f32 %v1191, %v1230
    %v1232 = vpop.f32.mrf.mxu0
    %v1233 = vpop.f32.mrf.mxu0
    %v1234 = vpop.f32.mrf.mxu0
    %1235 = vdwg.mxu0
    %1236 = vmatprep.subr.bf16.mxu0 0
    %1237 = vmatpush1.bf16.msra.mxu0 %v939
    %1238 = vmatprep.subr.bf16.mxu0 0
    %1239 = vmatpush1.bf16.msra.mxu0 %v938
    %1240 = vmatprep.subr.bf16.mxu0 0
    %1241 = vmatpush1.bf16.msra.mxu0 %v937
    %1242 = vmatprep.subr.bf16.mxu0 0
    %1243 = vmatpush1.bf16.msra.mxu0 %v936
    %1244 = vmatprep.subr.bf16.mxu0 0
    %1245 = vmatpush1.bf16.msra.mxu0 %v935
    %1246 = vmatprep.subr.bf16.mxu0 0
    %1247 = vmatpush1.bf16.msra.mxu0 %v934
    %1248 = vmatprep.subr.bf16.mxu0 0
    %1249 = vmatpush1.bf16.msra.mxu0 %v933
    %1250 = vmatprep.subr.bf16.mxu0 0
    %1251 = vmatpush1.bf16.msra.mxu0 %v932
    %1252 = vmatprep.subr.bf16.mxu0 0
    %1253 = vmatpush2.bf16.msra.mxu0 %v947
    %1254 = vmatprep.subr.bf16.mxu0 0
    %1255 = vmatpush2.bf16.msra.mxu0 %v946
    %1256 = vmatprep.subr.bf16.mxu0 0
    %1257 = vmatpush2.bf16.msra.mxu0 %v945
    %1258 = vmatprep.subr.bf16.mxu0 0
    %1259 = vmatpush2.bf16.msra.mxu0 %v944
    %1260 = vmatprep.subr.bf16.mxu0 0
    %1261 = vmatpush2.bf16.msra.mxu0 %v943
    %1262 = vmatprep.subr.bf16.mxu0 0
    %1263 = vmatpush2.bf16.msra.mxu0 %v942
    %1264 = vmatprep.subr.bf16.mxu0 0
    %1265 = vmatpush2.bf16.msra.mxu0 %v941
    %1266 = vmatprep.subr.bf16.mxu0 0
    %1267 = vmatpush2.bf16.msra.mxu0 %v940
    %1268 = vmatprep.mubr.bf16.mxu0 %v361
    %1269 = vmatmul.mubr.bf16.gmra.mxu0 %v360
    %v1270 = vpop.f32.mrf.mxu0
    %v1271 = vadd.f32 %v1231, %v1270
    %v1272 = vpop.f32.mrf.mxu0
    %v1273 = vpop.f32.mrf.mxu0
    %v1274 = vpop.f32.mrf.mxu0
    %1275 = vdwg.mxu0
    %1276 = vmatprep.subr.bf16.mxu0 0
    %1277 = vmatpush1.bf16.msra.mxu0 %v955
    %1278 = vmatprep.subr.bf16.mxu0 0
    %1279 = vmatpush1.bf16.msra.mxu0 %v954
    %1280 = vmatprep.subr.bf16.mxu0 0
    %1281 = vmatpush1.bf16.msra.mxu0 %v953
    %1282 = vmatprep.subr.bf16.mxu0 0
    %1283 = vmatpush1.bf16.msra.mxu0 %v952
    %1284 = vmatprep.subr.bf16.mxu0 0
    %1285 = vmatpush1.bf16.msra.mxu0 %v951
    %1286 = vmatprep.subr.bf16.mxu0 0
    %1287 = vmatpush1.bf16.msra.mxu0 %v950
    %1288 = vmatprep.subr.bf16.mxu0 0
    %1289 = vmatpush1.bf16.msra.mxu0 %v949
    %1290 = vmatprep.subr.bf16.mxu0 0
    %1291 = vmatpush1.bf16.msra.mxu0 %v948
    %1292 = vmatprep.subr.bf16.mxu0 0
    %1293 = vmatpush2.bf16.msra.mxu0 %v963
    %1294 = vmatprep.subr.bf16.mxu0 0
    %1295 = vmatpush2.bf16.msra.mxu0 %v962
    %1296 = vmatprep.subr.bf16.mxu0 0
    %1297 = vmatpush2.bf16.msra.mxu0 %v961
    %1298 = vmatprep.subr.bf16.mxu0 0
    %1299 = vmatpush2.bf16.msra.mxu0 %v960
    %1300 = vmatprep.subr.bf16.mxu0 0
    %1301 = vmatpush2.bf16.msra.mxu0 %v959
    %1302 = vmatprep.subr.bf16.mxu0 0
    %1303 = vmatpush2.bf16.msra.mxu0 %v958
    %1304 = vmatprep.subr.bf16.mxu0 0
    %1305 = vmatpush2.bf16.msra.mxu0 %v957
    %1306 = vmatprep.subr.bf16.mxu0 0
    %1307 = vmatpush2.bf16.msra.mxu0 %v956
    %1308 = vmatprep.mubr.bf16.mxu0 %v363
    %1309 = vmatmul.mubr.bf16.gmra.mxu0 %v362
    %v1310 = vpop.f32.mrf.mxu0
    %v1311 = vadd.f32 %v1271, %v1310
    %v1312 = vpop.f32.mrf.mxu0
    %v1313 = vpop.f32.mrf.mxu0
    %v1314 = vpop.f32.mrf.mxu0
    %1315 = vdwg.mxu0
    %1316 = vmatprep.subr.bf16.mxu0 0
    %1317 = vmatpush1.bf16.msra.mxu0 %v971
    %1318 = vmatprep.subr.bf16.mxu0 0
    %1319 = vmatpush1.bf16.msra.mxu0 %v970
    %1320 = vmatprep.subr.bf16.mxu0 0
    %1321 = vmatpush1.bf16.msra.mxu0 %v969
    %1322 = vmatprep.subr.bf16.mxu0 0
    %1323 = vmatpush1.bf16.msra.mxu0 %v968
    %1324 = vmatprep.subr.bf16.mxu0 0
    %1325 = vmatpush1.bf16.msra.mxu0 %v967
    %1326 = vmatprep.subr.bf16.mxu0 0
    %1327 = vmatpush1.bf16.msra.mxu0 %v966
    %1328 = vmatprep.subr.bf16.mxu0 0
    %1329 = vmatpush1.bf16.msra.mxu0 %v965
    %1330 = vmatprep.subr.bf16.mxu0 0
    %1331 = vmatpush1.bf16.msra.mxu0 %v964
    %1332 = vmatprep.subr.bf16.mxu0 0
    %1333 = vmatpush2.bf16.msra.mxu0 %v979
    %1334 = vmatprep.subr.bf16.mxu0 0
    %1335 = vmatpush2.bf16.msra.mxu0 %v978
    %1336 = vmatprep.subr.bf16.mxu0 0
    %1337 = vmatpush2.bf16.msra.mxu0 %v977
    %1338 = vmatprep.subr.bf16.mxu0 0
    %1339 = vmatpush2.bf16.msra.mxu0 %v976
    %1340 = vmatprep.subr.bf16.mxu0 0
    %1341 = vmatpush2.bf16.msra.mxu0 %v975
    %1342 = vmatprep.subr.bf16.mxu0 0
    %1343 = vmatpush2.bf16.msra.mxu0 %v974
    %1344 = vmatprep.subr.bf16.mxu0 0
    %1345 = vmatpush2.bf16.msra.mxu0 %v973
    %1346 = vmatprep.subr.bf16.mxu0 0
    %1347 = vmatpush2.bf16.msra.mxu0 %v972
    %1348 = vmatprep.mubr.bf16.mxu0 %v365
    %1349 = vmatmul.mubr.bf16.gmra.mxu0 %v364
    %v1350 = vpop.f32.mrf.mxu0
    %v1351 = vadd.f32 %v1311, %v1350
    %v1352 = vpop.f32.mrf.mxu0
    %v1353 = vpop.f32.mrf.mxu0
    %v1354 = vpop.f32.mrf.mxu0
    %1355 = vdwg.mxu0
    %1356 = vmatprep.subr.bf16.mxu0 0
    %1357 = vmatpush1.bf16.msra.mxu0 %v987
    %1358 = vmatprep.subr.bf16.mxu0 0
    %1359 = vmatpush1.bf16.msra.mxu0 %v986
    %1360 = vmatprep.subr.bf16.mxu0 0
    %1361 = vmatpush1.bf16.msra.mxu0 %v985
    %1362 = vmatprep.subr.bf16.mxu0 0
    %1363 = vmatpush1.bf16.msra.mxu0 %v984
    %1364 = vmatprep.subr.bf16.mxu0 0
    %1365 = vmatpush1.bf16.msra.mxu0 %v983
    %1366 = vmatprep.subr.bf16.mxu0 0
    %1367 = vmatpush1.bf16.msra.mxu0 %v982
    %1368 = vmatprep.subr.bf16.mxu0 0
    %1369 = vmatpush1.bf16.msra.mxu0 %v981
    %1370 = vmatprep.subr.bf16.mxu0 0
    %1371 = vmatpush1.bf16.msra.mxu0 %v980
    %1372 = vmatprep.subr.bf16.mxu0 0
    %1373 = vmatpush2.bf16.msra.mxu0 %v995
    %1374 = vmatprep.subr.bf16.mxu0 0
    %1375 = vmatpush2.bf16.msra.mxu0 %v994
    %1376 = vmatprep.subr.bf16.mxu0 0
    %1377 = vmatpush2.bf16.msra.mxu0 %v993
    %1378 = vmatprep.subr.bf16.mxu0 0
    %1379 = vmatpush2.bf16.msra.mxu0 %v992
    %1380 = vmatprep.subr.bf16.mxu0 0
    %1381 = vmatpush2.bf16.msra.mxu0 %v991
    %1382 = vmatprep.subr.bf16.mxu0 0
    %1383 = vmatpush2.bf16.msra.mxu0 %v990
    %1384 = vmatprep.subr.bf16.mxu0 0
    %1385 = vmatpush2.bf16.msra.mxu0 %v989
    %1386 = vmatprep.subr.bf16.mxu0 0
    %1387 = vmatpush2.bf16.msra.mxu0 %v988
    %1388 = vmatprep.mubr.bf16.mxu0 %v367
    %1389 = vmatmul.mubr.bf16.gmra.mxu0 %v366
    %v1390 = vpop.f32.mrf.mxu0
    %v1391 = vadd.f32 %v1351, %v1390
    %v1392 = vpop.f32.mrf.mxu0
    %v1393 = vpop.f32.mrf.mxu0
    %v1394 = vpop.f32.mrf.mxu0
    %1395 = vdwg.mxu0
    %1396 = vmatprep.subr.bf16.mxu0 0
    %1397 = vmatpush1.bf16.msra.mxu0 %v1003
    %1398 = vmatprep.subr.bf16.mxu0 0
    %1399 = vmatpush1.bf16.msra.mxu0 %v1002
    %1400 = vmatprep.subr.bf16.mxu0 0
    %1401 = vmatpush1.bf16.msra.mxu0 %v1001
    %1402 = vmatprep.subr.bf16.mxu0 0
    %1403 = vmatpush1.bf16.msra.mxu0 %v1000
    %1404 = vmatprep.subr.bf16.mxu0 0
    %1405 = vmatpush1.bf16.msra.mxu0 %v999
    %1406 = vmatprep.subr.bf16.mxu0 0
    %1407 = vmatpush1.bf16.msra.mxu0 %v998
    %1408 = vmatprep.subr.bf16.mxu0 0
    %1409 = vmatpush1.bf16.msra.mxu0 %v997
    %1410 = vmatprep.subr.bf16.mxu0 0
    %1411 = vmatpush1.bf16.msra.mxu0 %v996
    %1412 = vmatprep.subr.bf16.mxu0 0
    %1413 = vmatpush2.bf16.msra.mxu0 %v1011
    %1414 = vmatprep.subr.bf16.mxu0 0
    %1415 = vmatpush2.bf16.msra.mxu0 %v1010
    %1416 = vmatprep.subr.bf16.mxu0 0
    %1417 = vmatpush2.bf16.msra.mxu0 %v1009
    %1418 = vmatprep.subr.bf16.mxu0 0
    %1419 = vmatpush2.bf16.msra.mxu0 %v1008
    %1420 = vmatprep.subr.bf16.mxu0 0
    %1421 = vmatpush2.bf16.msra.mxu0 %v1007
    %1422 = vmatprep.subr.bf16.mxu0 0
    %1423 = vmatpush2.bf16.msra.mxu0 %v1006
    %1424 = vmatprep.subr.bf16.mxu0 0
    %1425 = vmatpush2.bf16.msra.mxu0 %v1005
    %1426 = vmatprep.subr.bf16.mxu0 0
    %1427 = vmatpush2.bf16.msra.mxu0 %v1004
    %1428 = vmatprep.mubr.bf16.mxu0 %v369
    %1429 = vmatmul.mubr.bf16.gmra.mxu0 %v368
    %v1430 = vpop.f32.mrf.mxu0
    %v1431 = vadd.f32 %v1391, %v1430
    %v1432 = vpop.f32.mrf.mxu0
    %v1433 = vpop.f32.mrf.mxu0
    %v1434 = vpop.f32.mrf.mxu0
    %1435 = vdwg.mxu0
    %1436 = vmatprep.subr.bf16.mxu0 0
    %1437 = vmatpush1.bf16.msra.mxu0 %v1019
    %1438 = vmatprep.subr.bf16.mxu0 0
    %1439 = vmatpush1.bf16.msra.mxu0 %v1018
    %1440 = vmatprep.subr.bf16.mxu0 0
    %1441 = vmatpush1.bf16.msra.mxu0 %v1017
    %1442 = vmatprep.subr.bf16.mxu0 0
    %1443 = vmatpush1.bf16.msra.mxu0 %v1016
    %1444 = vmatprep.subr.bf16.mxu0 0
    %1445 = vmatpush1.bf16.msra.mxu0 %v1015
    %1446 = vmatprep.subr.bf16.mxu0 0
    %1447 = vmatpush1.bf16.msra.mxu0 %v1014
    %1448 = vmatprep.subr.bf16.mxu0 0
    %1449 = vmatpush1.bf16.msra.mxu0 %v1013
    %1450 = vmatprep.subr.bf16.mxu0 0
    %1451 = vmatpush1.bf16.msra.mxu0 %v1012
    %1452 = vmatprep.subr.bf16.mxu0 0
    %1453 = vmatpush2.bf16.msra.mxu0 %v1027
    %1454 = vmatprep.subr.bf16.mxu0 0
    %1455 = vmatpush2.bf16.msra.mxu0 %v1026
    %1456 = vmatprep.subr.bf16.mxu0 0
    %1457 = vmatpush2.bf16.msra.mxu0 %v1025
    %1458 = vmatprep.subr.bf16.mxu0 0
    %1459 = vmatpush2.bf16.msra.mxu0 %v1024
    %1460 = vmatprep.subr.bf16.mxu0 0
    %1461 = vmatpush2.bf16.msra.mxu0 %v1023
    %1462 = vmatprep.subr.bf16.mxu0 0
    %1463 = vmatpush2.bf16.msra.mxu0 %v1022
    %1464 = vmatprep.subr.bf16.mxu0 0
    %1465 = vmatpush2.bf16.msra.mxu0 %v1021
    %1466 = vmatprep.subr.bf16.mxu0 0
    %1467 = vmatpush2.bf16.msra.mxu0 %v1020
    %1468 = vmatprep.mubr.bf16.mxu0 %v371
    %1469 = vmatmul.mubr.bf16.gmra.mxu0 %v370
    %v1470 = vpop.f32.mrf.mxu0
    %v1471 = vadd.f32 %v1431, %v1470
    %v1472 = vpop.f32.mrf.mxu0
    %v1473 = vpop.f32.mrf.mxu0
    %v1474 = vpop.f32.mrf.mxu0
    %1475 = vdwg.mxu0
    %v1476 = vmax.f32 %v1471, 0.0
    %v1477 = vpack.c.bf16 %v1476, %v1476
    %v1478 = vld [vmem:[#allocation7] sm:$0xf]
    %v1479 = vld [vmem:[#allocation7 + $0x4] sm:$0xf]
    %v1480 = vld [vmem:[#allocation7 + $0x8] sm:$0xf]
    %v1481 = vld [vmem:[#allocation7 + $0xc] sm:$0xf]
    %v1482 = vld [vmem:[#allocation7 + $0x10] sm:$0xf]
    %v1483 = vld [vmem:[#allocation7 + $0x14] sm:$0xf]
    %v1484 = vld [vmem:[#allocation7 + $0x18] sm:$0xf]
    %v1485 = vld [vmem:[#allocation7 + $0x1c] sm:$0xf]
    %v1486 = vld [vmem:[#allocation7 + $0x20] sm:$0xf]
    %v1487 = vld [vmem:[#allocation7 + $0x24] sm:$0xf]
    %v1488 = vld [vmem:[#allocation7 + $0x28] sm:$0xf]
    %v1489 = vld [vmem:[#allocation7 + $0x2c] sm:$0xf]
    %v1490 = vld [vmem:[#allocation7 + $0x30] sm:$0xf]
    %v1491 = vld [vmem:[#allocation7 + $0x34] sm:$0xf]
    %v1492 = vld [vmem:[#allocation7 + $0x38] sm:$0xf]
    %v1493 = vld [vmem:[#allocation7 + $0x3c] sm:$0xf]
    %v1494 = vld [vmem:[%s4] sm:$0x1]
    %v1496 = vlaneseq
    %v1497 = vshrl.u32 %v1496, 7
    %v1498 = vsub.s32 0, %v1497
    %v1499 = vrot.slane %v1494, %v1498
    %v1517 = vunpack.c.l.b16 %v1478
    %v1518 = vunpack.c.l.b16 %v1479
    %v1519 = vunpack.c.l.b16 %v1480
    %v1520 = vunpack.c.l.b16 %v1481
    %v1521 = vunpack.c.l.b16 %v1482
    %v1522 = vunpack.c.l.b16 %v1483
    %v1523 = vunpack.c.l.b16 %v1484
    %v1524 = vunpack.c.l.b16 %v1485
    %v1525 = vunpack.c.l.b16 %v1486
    %v1526 = vunpack.c.l.b16 %v1487
    %v1527 = vunpack.c.l.b16 %v1488
    %v1528 = vunpack.c.l.b16 %v1489
    %v1529 = vunpack.c.l.b16 %v1490
    %v1530 = vunpack.c.l.b16 %v1491
    %v1531 = vunpack.c.l.b16 %v1492
    %v1532 = vunpack.c.l.b16 %v1493
    %v1533 = vpack.c.b16 %v1518, %v1517
    %v1534 = vpack.c.b16 %v1520, %v1519
    %v1535 = vpack.c.b16 %v1522, %v1521
    %v1536 = vpack.c.b16 %v1524, %v1523
    %v1537 = vpack.c.b16 %v1526, %v1525
    %v1538 = vpack.c.b16 %v1528, %v1527
    %v1539 = vpack.c.b16 %v1530, %v1529
    %v1540 = vpack.c.b16 %v1532, %v1531
    %1549 = vmatprep.subr.bf16.mxu0 0
    %1550 = vmatpush1.bf16.msra.mxu0 %v1540
    %1551 = vmatprep.subr.bf16.mxu0 0
    %1552 = vmatpush1.bf16.msra.mxu0 %v1539
    %1553 = vmatprep.subr.bf16.mxu0 0
    %1554 = vmatpush1.bf16.msra.mxu0 %v1538
    %1555 = vmatprep.subr.bf16.mxu0 0
    %1556 = vmatpush1.bf16.msra.mxu0 %v1537
    %1557 = vmatprep.subr.bf16.mxu0 0
    %1558 = vmatpush1.bf16.msra.mxu0 %v1536
    %1559 = vmatprep.subr.bf16.mxu0 0
    %1560 = vmatpush1.bf16.msra.mxu0 %v1535
    %1561 = vmatprep.subr.bf16.mxu0 0
    %1562 = vmatpush1.bf16.msra.mxu0 %v1534
    %1563 = vmatprep.subr.bf16.mxu0 0
    %1564 = vmatpush1.bf16.msra.mxu0 %v1533
    %1565 = vmatprep.subr.bf16.mxu0 0
    %1566 = vmatpush2.bf16.msra.mxu0 0
    %1567 = vmatprep.subr.bf16.mxu0 0
    %1568 = vmatpush2.bf16.msra.mxu0 0
    %1569 = vmatprep.subr.bf16.mxu0 0
    %1570 = vmatpush2.bf16.msra.mxu0 0
    %1571 = vmatprep.subr.bf16.mxu0 0
    %1572 = vmatpush2.bf16.msra.mxu0 0
    %1573 = vmatprep.subr.bf16.mxu0 0
    %1574 = vmatpush2.bf16.msra.mxu0 0
    %1575 = vmatprep.subr.bf16.mxu0 0
    %1576 = vmatpush2.bf16.msra.mxu0 0
    %1577 = vmatprep.subr.bf16.mxu0 0
    %1578 = vmatpush2.bf16.msra.mxu0 0
    %1579 = vmatprep.subr.bf16.mxu0 0
    %1580 = vmatpush2.bf16.msra.mxu0 0
    %1581 = vmatprep.mubr.bf16.mxu0 0
    %1582 = vmatmul.mubr.bf16.gmra.mxu0 %v1477
    %v1583 = vpop.f32.mrf.mxu0
    %v1584 = vadd.f32 %v1499, %v1583
    %v1585 = vpop.f32.mrf.mxu0
    %v1586 = vpop.f32.mrf.mxu0
    %v1587 = vpop.f32.mrf.mxu0
    %1588 = vdwg.mxu0
    %1589 = vst [vmem:[#allocation8] sm:$0xff] %v1584
    // Predicated region
    $region34: #{tpu_custom_call.1} parent=1 // pred_check
      _
    $region35: #{tpu_custom_call.1} parent=1 // pred_check_branch
      %1591 = sbr.rel (0) target = $region37
    $region36: #{tpu_custom_call.1} parent=1 // pred_region
      %s1593 = ssub.s32 128, 128
      %1594 = vsyncadd [#allocation4], %s1593
      %s1596 = sshll.u32 [#allocation8], 4
      %s1597 = int_to_ptr.vmem [resolvable:$true] %s1596
      %1599 = dma.vmem_to_hbm [thread:$0]  %s1597, 128, %s5, [#allocation4]
    $region37: #{tpu_custom_call.1} parent=1 // pred_fallthru
      _
    // Predicated region
    $region38: #{tpu_custom_call.1} parent=1 // pred_check
      _
    $region39: #{tpu_custom_call.1} parent=1 // pred_check_branch
      %1601 = sbr.rel (0) target = $region41
    $region40: #{tpu_custom_call.1} parent=1 // pred_region
      %1602 = dma.done [#allocation4], 128
    $region41: #{tpu_custom_call.1} parent=1 // pred_fallthru
      _
    %1603 = vsyncpa [#allocation3], 1
    %1604 = vsyncpa [#allocation6], 1
    %1605 = vsyncpa [#allocation4], 1

</llo_original>
